<compile_context>
chip_gen: v5e
topology: v5e:2x2
jax: 0.10.0
libtpu: 0.0.40
codegen_flags: <defaults>
</compile_context>

<pallas_src>
import functools
import math

import jax
import jax.numpy as jnp
from jax.experimental import pallas as pl
from jax.experimental.pallas import tpu as pltpu


def _pick_tile(total_rows, bytes_per_row, *, vmem_budget=8 << 20, cap=2048):
    """Largest row-tile that divides `total_rows` and keeps the double-buffered
    working set under `vmem_budget`.  Falls back to a single full-extent tile."""
    for cand in (2048, 1024, 512, 256, 128, 64, 32, 16, 8):
        if cand <= cap and total_rows % cand == 0 and 2 * cand * bytes_per_row <= vmem_budget:
            return cand
    return total_rows


# ---------------------------------------------------------------------------
# Pass 1: tiled GEMM (im2col patches @ weight) + per-tile BN partial statistics
# ---------------------------------------------------------------------------
def _conv_gemm_stats_kernel(p_ref, w_ref, conv_ref, stats_ref):
    # p_ref:     (TM, Kc)      bf16 im2col patch rows for this tile
    # w_ref:     (Kc, C_out)   bf16 conv weight, rows ordered (kh, kw, c_in)
    # conv_ref:  (TM, C_out)   f32 conv activations for this tile
    # stats_ref: (1, 2, C_out) f32 per-tile [sum, sum_of_squares]
    acc = jnp.dot(p_ref[...], w_ref[...], preferred_element_type=jnp.float32)
    conv_ref[...] = acc
    # Sublane reductions run on the XLU (off the MXU/VALU critical path).
    stats_ref[0, 0:1, :] = jnp.sum(acc, axis=0, keepdims=True)
    stats_ref[0, 1:2, :] = jnp.sum(acc * acc, axis=0, keepdims=True)


# ---------------------------------------------------------------------------
# Pass 2: fused BN scale/bias + LeakyReLU over lane-dense packed activations
# ---------------------------------------------------------------------------
def _bn_act_kernel(y_ref, scale_ref, bias_ref, o_ref, *, slope):
    # y_ref/o_ref: (TR, L) f32, channels repeat every C_out lanes inside a row
    # scale_ref/bias_ref: (1, L) f32, pre-tiled per-channel scale / bias
    y = y_ref[...] * scale_ref[...] + bias_ref[...]
    o_ref[...] = jnp.where(y >= 0, y, slope * y)


def leaky_relu_bn_conv2d(x_nchw, w_oihw, gamma, beta, *, stride, padding=0,
                         eps=1e-5, slope=0.01):
    """Conv2d(bias=False) -> BatchNorm2d (training, batch stats) -> LeakyReLU(slope).

    x_nchw: (N, C_in, H, W);  w_oihw: (C_out, C_in, K, K)  (PyTorch Conv2d layout).
    """
    N, C_in, H, W = x_nchw.shape
    C_out, _, K, _ = w_oihw.shape
    H_out = (H + 2 * padding - K) // stride + 1
    W_out = (W + 2 * padding - K) // stride + 1
    M = N * H_out * W_out
    Kc = K * K * C_in

    # ---- im2col (layout glue, XLA side), bf16 to halve HBM traffic ---------
    x_nhwc = jnp.transpose(x_nchw, (0, 2, 3, 1)).astype(jnp.bfloat16)
    x_pad = jnp.pad(x_nhwc, ((0, 0), (padding, padding), (padding, padding), (0, 0)))
    taps = []
    for kh in range(K):
        for kw in range(K):
            taps.append(jax.lax.slice(
                x_pad,
                (0, kh, kw, 0),
                (N, kh + (H_out - 1) * stride + 1, kw + (W_out - 1) * stride + 1, C_in),
                (1, stride, stride, 1)))
    # features ordered (kh, kw, c_in); rows ordered (n, h_out, w_out)
    patches = jnp.concatenate(taps, axis=-1).reshape(M, Kc)

    # Conv2d weight (C_out, C_in, K, K) -> (K, K, C_in, C_out) -> (Kc, C_out), bf16
    w_mat = jnp.transpose(w_oihw, (2, 3, 1, 0)).reshape(Kc, C_out).astype(jnp.bfloat16)

    # ---- pass 1: GEMM + partial stats --------------------------------------
    bytes_per_row1 = Kc * 2 + C_out * 4          # bf16 patches in + f32 conv out
    TM = _pick_tile(M, bytes_per_row1)
    G = M // TM if M % TM == 0 else 1
    conv_flat, stats = pl.pallas_call(
        _conv_gemm_stats_kernel,
        out_shape=(jax.ShapeDtypeStruct((M, C_out), jnp.float32),
                   jax.ShapeDtypeStruct((G, 2, C_out), jnp.float32)),
        grid=(G,),
        in_specs=[pl.BlockSpec((TM, Kc), lambda i: (i, 0)),
                  pl.BlockSpec((Kc, C_out), lambda i: (0, 0))],
        out_specs=(pl.BlockSpec((TM, C_out), lambda i: (i, 0)),
                   pl.BlockSpec((1, 2, C_out), lambda i: (i, 0, 0))),
        compiler_params=pltpu.CompilerParams(dimension_semantics=("parallel",)),
    )(patches, w_mat)

    # ---- BN finalize: fold into per-channel scale / bias (tiny, f32) -------
    tot = jnp.sum(stats, axis=0)                       # (2, C_out)
    mean = tot[0] / M
    var = jnp.maximum(tot[1] / M - mean * mean, 0.0)   # biased (training-mode) variance
    inv = jax.lax.rsqrt(var + eps)
    scale = gamma.astype(jnp.float32) * inv            # (C_out,)
    bias = beta.astype(jnp.float32) - mean * scale     # (C_out,)

    # ---- pass 2: lane-dense scale/bias + LeakyReLU --------------------------
    # Pack rows to L lanes where L is the smallest multiple of C_out that is a
    # multiple of 128 -> unmasked, fully lane-occupied vector loads/stores.
    g = math.gcd(C_out, 128)
    L = (128 // g) * C_out
    if (M * C_out) % L != 0 or L > 4096:
        L = C_out                                      # fallback: channels-minor rows
    R = (M * C_out) // L
    conv_packed = conv_flat.reshape(R, L)              # free row-major repack (wrapper)
    reps = L // C_out
    scale_row = jnp.tile(scale, reps).reshape(1, L)
    bias_row = jnp.tile(bias, reps).reshape(1, L)

    bytes_per_row2 = 2 * L * 4                         # f32 in + f32 out
    TR = _pick_tile(R, bytes_per_row2)
    G2 = R // TR if R % TR == 0 else 1
    out_packed = pl.pallas_call(
        functools.partial(_bn_act_kernel, slope=slope),
        out_shape=jax.ShapeDtypeStruct((R, L), jnp.float32),
        grid=(G2,),
        in_specs=[pl.BlockSpec((TR, L), lambda i: (i, 0)),
                  pl.BlockSpec((1, L), lambda i: (0, 0)),
                  pl.BlockSpec((1, L), lambda i: (0, 0))],
        out_specs=pl.BlockSpec((TR, L), lambda i: (i, 0)),
        compiler_params=pltpu.CompilerParams(dimension_semantics=("parallel",)),
    )(conv_packed, scale_row, bias_row)

    # packed rows are exactly the row-major flatten of (N, H_out, W_out, C_out)
    out_nhwc = out_packed.reshape(N, H_out, W_out, C_out)
    return jnp.transpose(out_nhwc, (0, 3, 1, 2))       # back to NCHW


def _reference(x_nchw, w_oihw, gamma, beta, *, stride, padding, eps=1e-5, slope=0.01):
    """Pure-JAX reference (lax conv, two-pass BN) for correctness checking."""
    y = jax.lax.conv_general_dilated(
        x_nchw.astype(jnp.float32), w_oihw.astype(jnp.float32),
        window_strides=(stride, stride),
        padding=[(padding, padding), (padding, padding)],
        dimension_numbers=("NCHW", "OIHW", "NCHW"))
    mean = y.mean(axis=(0, 2, 3), keepdims=True)
    var = ((y - mean) ** 2).mean(axis=(0, 2, 3), keepdims=True)
    yn = (y - mean) * jax.lax.rsqrt(var + eps)
    yn = yn * gamma.reshape(1, -1, 1, 1) + beta.reshape(1, -1, 1, 1)
    return jnp.where(yn >= 0, yn, slope * yn)


if __name__ == "__main__":
    # Module hyperparameters (small shapes consistent with the PyTorch module).
    n_in, n_out = 4, 8
    kernel_size, stride, padding = 3, 1, 1
    N, H, W = 2, 16, 16

    key = jax.random.PRNGKey(0)
    kx, kw = jax.random.split(key)
    x = jax.random.normal(kx, (N, n_in, H, W), dtype=jnp.float32)
    # utils.gaussian_weights_init -> conv weight ~ N(0, 0.02); BN affine init: gamma=1, beta=0
    w = 0.02 * jax.random.normal(kw, (n_out, n_in, kernel_size, kernel_size),
                                 dtype=jnp.float32)
    gamma = jnp.ones((n_out,), jnp.float32)
    beta = jnp.zeros((n_out,), jnp.float32)

    out = leaky_relu_bn_conv2d(x, w, gamma, beta, stride=stride, padding=padding)
    out = jax.block_until_ready(out)

    H_out = (H + 2 * padding - kernel_size) // stride + 1
    W_out = (W + 2 * padding - kernel_size) // stride + 1
    assert out.shape == (N, n_out, H_out, W_out), (out.shape, (N, n_out, H_out, W_out))

    # Kernel uses bf16 MXU operands with f32 accumulation; compare against a reference
    # built on the same bf16-rounded operands so tolerances stay tight.
    x_q = x.astype(jnp.bfloat16).astype(jnp.float32)
    w_q = w.astype(jnp.bfloat16).astype(jnp.float32)
    ref = _reference(x_q, w_q, gamma, beta, stride=stride, padding=padding)
    assert jnp.allclose(out, ref, rtol=1e-3, atol=1e-3), \
        float(jnp.max(jnp.abs(out - ref)))

    print("KERNEL_OK")
</pallas_src>

<mosaic_0001>
module attributes {stable_mosaic.version = 11 : i64} {
  func.func @_conv_gemm_stats_kernel(%arg0: i32, %arg1: memref<512x36xbf16, #tpu.memory_space<vmem>>, %arg2: memref<36x8xbf16, #tpu.memory_space<vmem>>, %arg3: memref<512x8xf32, #tpu.memory_space<vmem>>, %arg4: memref<1x2x8xf32, #tpu.memory_space<vmem>>) attributes {dimension_semantics = [#tpu.dimension_semantics<parallel>], iteration_bounds = array<i64: 1>, scalar_prefetch = 0 : i64, scratch_operands = 0 : i64, tpu.core_type = #tpu.core_type<tc>, window_params = [{transform_indices = @transform_0, window_bounds = array<i64: 512, 36>}, {pipeline_mode = #tpu.pipeline_mode<synchronous>, transform_indices = @transform_1, window_bounds = array<i64: 36, 8>}, {transform_indices = @transform_2, window_bounds = array<i64: 512, 8>}, {transform_indices = @transform_3, window_bounds = array<i64: 1, 2, 8>}]} {
    %c0 = arith.constant 0 : index
    %c0_0 = arith.constant 0 : index
    %0 = vector.load %arg1[%c0, %c0_0] : memref<512x36xbf16, #tpu.memory_space<vmem>>, vector<512x36xbf16>
    %c0_1 = arith.constant 0 : index
    %c0_2 = arith.constant 0 : index
    %1 = vector.load %arg2[%c0_1, %c0_2] : memref<36x8xbf16, #tpu.memory_space<vmem>>, vector<36x8xbf16>
    %cst = arith.constant dense<0.000000e+00> : vector<512x8xf32>
    %2 = tpu.matmul %0, %1, %cst {dimension_numbers = #tpu.dot_dimension_numbers<[1], [0], [0], [1], [0, 0, 1, 1], [], []>} : vector<512x36xbf16>, vector<36x8xbf16>, vector<512x8xf32> -> vector<512x8xf32>
    %c0_3 = arith.constant 0 : index
    %c0_4 = arith.constant 0 : index
    %3 = vector.load %arg3[%c0_3, %c0_4] : memref<512x8xf32, #tpu.memory_space<vmem>>, vector<512x8xf32>
    tpu.vector_store %arg3[%c0_3, %c0_4], %2 {strides = array<i32>} : memref<512x8xf32, #tpu.memory_space<vmem>>, vector<512x8xf32>,
    %cst_5 = arith.constant dense<0.000000e+00> : vector<8xf32>
    %4 = vector.multi_reduction <add>, %2, %cst_5 [0] : vector<512x8xf32> to vector<8xf32>
    %5 = vector.shape_cast %4 : vector<8xf32> to vector<1x8xf32>
    %c0_6 = arith.constant 0 : index
    %c0_7 = arith.constant 0 : index
    %c0_8 = arith.constant 0 : index
    %6 = vector.load %arg4[%c0_6, %c0_7, %c0_8] : memref<1x2x8xf32, #tpu.memory_space<vmem>>, vector<1x1x8xf32>
    %7 = vector.shape_cast %6 : vector<1x1x8xf32> to vector<1x8xf32>
    %8 = vector.shape_cast %5 : vector<1x8xf32> to vector<1x1x8xf32>
    tpu.vector_store %arg4[%c0_6, %c0_7, %c0_8], %8 {strides = array<i32>} : memref<1x2x8xf32, #tpu.memory_space<vmem>>, vector<1x1x8xf32>,
    %9 = arith.mulf %2, %2 : vector<512x8xf32>
    %cst_9 = arith.constant dense<0.000000e+00> : vector<8xf32>
    %10 = vector.multi_reduction <add>, %9, %cst_9 [0] : vector<512x8xf32> to vector<8xf32>
    %11 = vector.shape_cast %10 : vector<8xf32> to vector<1x8xf32>
    %c0_10 = arith.constant 0 : index
    %c1 = arith.constant 1 : index
    %c0_11 = arith.constant 0 : index
    %12 = vector.load %arg4[%c0_10, %c1, %c0_11] : memref<1x2x8xf32, #tpu.memory_space<vmem>>, vector<1x1x8xf32>
    %13 = vector.shape_cast %12 : vector<1x1x8xf32> to vector<1x8xf32>
    %14 = vector.shape_cast %11 : vector<1x8xf32> to vector<1x1x8xf32>
    tpu.vector_store %arg4[%c0_10, %c1, %c0_11], %14 {strides = array<i32>} : memref<1x2x8xf32, #tpu.memory_space<vmem>>, vector<1x1x8xf32>,
    return
  }
  func.func @transform_0(%arg0: i32) -> (i32, i32) {
    %c0_i32 = arith.constant 0 : i32
    %c0_i32_0 = arith.constant 0 : i32
    return %arg0, %c0_i32 : i32, i32
  }
  func.func @transform_1(%arg0: i32) -> (i32, i32) {
    %c0_i32 = arith.constant 0 : i32
    %c0_i32_0 = arith.constant 0 : i32
    %c0_i32_1 = arith.constant 0 : i32
    return %c0_i32, %c0_i32_0 : i32, i32
  }
  func.func @transform_2(%arg0: i32) -> (i32, i32) {
    %c0_i32 = arith.constant 0 : i32
    %c0_i32_0 = arith.constant 0 : i32
    return %arg0, %c0_i32 : i32, i32
  }
  func.func @transform_3(%arg0: i32) -> (i32, i32, i32) {
    %c0_i32 = arith.constant 0 : i32
    %c0_i32_0 = arith.constant 0 : i32
    %c0_i32_1 = arith.constant 0 : i32
    return %arg0, %c0_i32, %c0_i32_0 : i32, i32, i32
  }
}

</mosaic_0001>

<llo_original>
// kernel: tpu_custom_call.1
$region0: #{tpu_custom_call.1}
  #allocation0 [shape = 'u32[]', space=smem, size = 0x4, offset = 0x4, fixed_abs, tag = 'smem constant byte address 0x4 - core index']
  #allocation1 [shape = 'u32[72,128]{1,0:T(1,128)}', space=vmem, size = 0x9000, scoped, tag = 'internal scratch']
  %s0 = inlined_call_operand.vmem [shape: bf16[512,36], index: 0, kind: input, shape index: {}]
  %s1 = inlined_call_operand.vmem [shape: bf16[36,8], index: 1, kind: input, shape index: {}]
  %s2 = inlined_call_operand.vmem [shape: f32[512,8], index: 2, kind: output, shape index: {0}]
  %s3 = inlined_call_operand.hbm [shape: f32[1,2,8], index: 3, kind: output, shape index: {1}]
  %4 = xla_tuple %s2, %s3
  %s5 = sld [smem:[#allocation0]]
  $region26: #{tpu_custom_call.1} parent=0
    _
  %s7 = ssub.s32 1, %s5
  %s8 = scalar_select 0, %s7, %s5
  $region1: #{tpu_custom_call.1} parent=0
    #allocation2 [shape = 'u8[1024]{0}', space=vmem, size = 0x400, scoped, tag = 'output window, operand 1, single buffered']
    #allocation3 [shape = 's32[1]{0}', space=sflag, size = 0x4, scoped, tag = 'scoped memory for tpu_custom_call.1']
    %9 = vsyncpa [#allocation3], 0
    // Predicated region
    $region2: #{tpu_custom_call.1} parent=1 // pred_check
      _
    $region3: #{tpu_custom_call.1} parent=1 // pred_check_branch
      %11 = sbr.rel (0) target = $region5
    $region4: #{tpu_custom_call.1} parent=1 // pred_region
      _
    $region5: #{tpu_custom_call.1} parent=1 // pred_fallthru
      _
    // Predicated region
    $region6: #{tpu_custom_call.1} parent=1 // pred_check
      _
    $region7: #{tpu_custom_call.1} parent=1 // pred_check_branch
      %13 = sbr.rel (0) target = $region9
    $region8: #{tpu_custom_call.1} parent=1 // pred_region
      _
    $region9: #{tpu_custom_call.1} parent=1 // pred_fallthru
      _
    %v15 = vld [vmem:[%s0] sm:$0xf]
    %v16 = vld [vmem:[%s0 + $0x4] sm:$0xf]
    %v17 = vld [vmem:[%s0 + $0x8] sm:$0xf]
    %v18 = vld [vmem:[%s0 + $0xc] sm:$0xf]
    %v19 = vld [vmem:[%s0 + $0x10] sm:$0xf]
    %v20 = vld [vmem:[%s0 + $0x14] sm:$0xf]
    %v21 = vld [vmem:[%s0 + $0x18] sm:$0xf]
    %v22 = vld [vmem:[%s0 + $0x1c] sm:$0xf]
    %v23 = vld [vmem:[%s0 + $0x20] sm:$0xf]
    %v24 = vld [vmem:[%s0 + $0x24] sm:$0xf]
    %v25 = vld [vmem:[%s0 + $0x28] sm:$0xf]
    %v26 = vld [vmem:[%s0 + $0x2c] sm:$0xf]
    %v27 = vld [vmem:[%s0 + $0x30] sm:$0xf]
    %v28 = vld [vmem:[%s0 + $0x34] sm:$0xf]
    %v29 = vld [vmem:[%s0 + $0x38] sm:$0xf]
    %v30 = vld [vmem:[%s0 + $0x3c] sm:$0xf]
    %v31 = vld [vmem:[%s0 + $0x40] sm:$0xf]
    %v32 = vld [vmem:[%s0 + $0x44] sm:$0xf]
    %v33 = vld [vmem:[%s0 + $0x48] sm:$0xf]
    %v34 = vld [vmem:[%s0 + $0x4c] sm:$0xf]
    %v35 = vld [vmem:[%s0 + $0x50] sm:$0xf]
    %v36 = vld [vmem:[%s0 + $0x54] sm:$0xf]
    %v37 = vld [vmem:[%s0 + $0x58] sm:$0xf]
    %v38 = vld [vmem:[%s0 + $0x5c] sm:$0xf]
    %v39 = vld [vmem:[%s0 + $0x60] sm:$0xf]
    %v40 = vld [vmem:[%s0 + $0x64] sm:$0xf]
    %v41 = vld [vmem:[%s0 + $0x68] sm:$0xf]
    %v42 = vld [vmem:[%s0 + $0x6c] sm:$0xf]
    %v43 = vld [vmem:[%s0 + $0x70] sm:$0xf]
    %v44 = vld [vmem:[%s0 + $0x74] sm:$0xf]
    %v45 = vld [vmem:[%s0 + $0x78] sm:$0xf]
    %v46 = vld [vmem:[%s0 + $0x7c] sm:$0xf]
    %v47 = vld [vmem:[%s0 + $0x80] sm:$0xf]
    %v48 = vld [vmem:[%s0 + $0x84] sm:$0xf]
    %v49 = vld [vmem:[%s0 + $0x88] sm:$0xf]
    %v50 = vld [vmem:[%s0 + $0x8c] sm:$0xf]
    %v51 = vld [vmem:[%s0 + $0x90] sm:$0xf]
    %v52 = vld [vmem:[%s0 + $0x94] sm:$0xf]
    %v53 = vld [vmem:[%s0 + $0x98] sm:$0xf]
    %v54 = vld [vmem:[%s0 + $0x9c] sm:$0xf]
    %v55 = vld [vmem:[%s0 + $0xa0] sm:$0xf]
    %v56 = vld [vmem:[%s0 + $0xa4] sm:$0xf]
    %v57 = vld [vmem:[%s0 + $0xa8] sm:$0xf]
    %v58 = vld [vmem:[%s0 + $0xac] sm:$0xf]
    %v59 = vld [vmem:[%s0 + $0xb0] sm:$0xf]
    %v60 = vld [vmem:[%s0 + $0xb4] sm:$0xf]
    %v61 = vld [vmem:[%s0 + $0xb8] sm:$0xf]
    %v62 = vld [vmem:[%s0 + $0xbc] sm:$0xf]
    %v63 = vld [vmem:[%s0 + $0xc0] sm:$0xf]
    %v64 = vld [vmem:[%s0 + $0xc4] sm:$0xf]
    %v65 = vld [vmem:[%s0 + $0xc8] sm:$0xf]
    %v66 = vld [vmem:[%s0 + $0xcc] sm:$0xf]
    %v67 = vld [vmem:[%s0 + $0xd0] sm:$0xf]
    %v68 = vld [vmem:[%s0 + $0xd4] sm:$0xf]
    %v69 = vld [vmem:[%s0 + $0xd8] sm:$0xf]
    %v70 = vld [vmem:[%s0 + $0xdc] sm:$0xf]
    %v71 = vld [vmem:[%s0 + $0xe0] sm:$0xf]
    %v72 = vld [vmem:[%s0 + $0xe4] sm:$0xf]
    %v73 = vld [vmem:[%s0 + $0xe8] sm:$0xf]
    %v74 = vld [vmem:[%s0 + $0xec] sm:$0xf]
    %v75 = vld [vmem:[%s0 + $0xf0] sm:$0xf]
    %v76 = vld [vmem:[%s0 + $0xf4] sm:$0xf]
    %v77 = vld [vmem:[%s0 + $0xf8] sm:$0xf]
    %v78 = vld [vmem:[%s0 + $0xfc] sm:$0xf]
    %v79 = vld [vmem:[%s1] sm:$0xf]
    %v80 = vld [vmem:[%s1 + $0x4] sm:$0xf]
    %v81 = vld [vmem:[%s1 + $0x8] sm:$0xf]
    %v82 = vld [vmem:[%s1 + $0xc] sm:$0xf]
    %v83 = vld [vmem:[%s1 + $0x10] sm:$0x3]
    %v148 = vunpack.c.l.b16 %v15
    %v149 = vunpack.c.l.b16 %v16
    %v150 = vunpack.c.l.b16 %v17
    %v151 = vunpack.c.l.b16 %v18
    %v152 = vunpack.c.l.b16 %v19
    %v153 = vunpack.c.l.b16 %v20
    %v154 = vunpack.c.l.b16 %v21
    %v155 = vunpack.c.l.b16 %v22
    %v156 = vunpack.c.l.b16 %v23
    %v157 = vunpack.c.l.b16 %v24
    %v158 = vunpack.c.l.b16 %v25
    %v159 = vunpack.c.l.b16 %v26
    %v160 = vunpack.c.l.b16 %v27
    %v161 = vunpack.c.l.b16 %v28
    %v162 = vunpack.c.l.b16 %v29
    %v163 = vunpack.c.l.b16 %v30
    %v164 = vunpack.c.l.b16 %v31
    %v165 = vunpack.c.l.b16 %v32
    %v166 = vunpack.c.l.b16 %v33
    %v167 = vunpack.c.l.b16 %v34
    %v168 = vunpack.c.l.b16 %v35
    %v169 = vunpack.c.l.b16 %v36
    %v170 = vunpack.c.l.b16 %v37
    %v171 = vunpack.c.l.b16 %v38
    %v172 = vunpack.c.l.b16 %v39
    %v173 = vunpack.c.l.b16 %v40
    %v174 = vunpack.c.l.b16 %v41
    %v175 = vunpack.c.l.b16 %v42
    %v176 = vunpack.c.l.b16 %v43
    %v177 = vunpack.c.l.b16 %v44
    %v178 = vunpack.c.l.b16 %v45
    %v179 = vunpack.c.l.b16 %v46
    %v180 = vunpack.c.l.b16 %v47
    %v181 = vunpack.c.l.b16 %v48
    %v182 = vunpack.c.l.b16 %v49
    %v183 = vunpack.c.l.b16 %v50
    %v184 = vunpack.c.l.b16 %v51
    %v185 = vunpack.c.l.b16 %v52
    %v186 = vunpack.c.l.b16 %v53
    %v187 = vunpack.c.l.b16 %v54
    %v188 = vunpack.c.l.b16 %v55
    %v189 = vunpack.c.l.b16 %v56
    %v190 = vunpack.c.l.b16 %v57
    %v191 = vunpack.c.l.b16 %v58
    %v192 = vunpack.c.l.b16 %v59
    %v193 = vunpack.c.l.b16 %v60
    %v194 = vunpack.c.l.b16 %v61
    %v195 = vunpack.c.l.b16 %v62
    %v196 = vunpack.c.l.b16 %v63
    %v197 = vunpack.c.l.b16 %v64
    %v198 = vunpack.c.l.b16 %v65
    %v199 = vunpack.c.l.b16 %v66
    %v200 = vunpack.c.l.b16 %v67
    %v201 = vunpack.c.l.b16 %v68
    %v202 = vunpack.c.l.b16 %v69
    %v203 = vunpack.c.l.b16 %v70
    %v204 = vunpack.c.l.b16 %v71
    %v205 = vunpack.c.l.b16 %v72
    %v206 = vunpack.c.l.b16 %v73
    %v207 = vunpack.c.l.b16 %v74
    %v208 = vunpack.c.l.b16 %v75
    %v209 = vunpack.c.l.b16 %v76
    %v210 = vunpack.c.l.b16 %v77
    %v211 = vunpack.c.l.b16 %v78
    %v212 = vpack.c.b16 %v149, %v148
    %v213 = vpack.c.b16 %v151, %v150
    %v214 = vpack.c.b16 %v153, %v152
    %v215 = vpack.c.b16 %v155, %v154
    %v216 = vpack.c.b16 %v157, %v156
    %v217 = vpack.c.b16 %v159, %v158
    %v218 = vpack.c.b16 %v161, %v160
    %v219 = vpack.c.b16 %v163, %v162
    %v220 = vpack.c.b16 %v165, %v164
    %v221 = vpack.c.b16 %v167, %v166
    %v222 = vpack.c.b16 %v169, %v168
    %v223 = vpack.c.b16 %v171, %v170
    %v224 = vpack.c.b16 %v173, %v172
    %v225 = vpack.c.b16 %v175, %v174
    %v226 = vpack.c.b16 %v177, %v176
    %v227 = vpack.c.b16 %v179, %v178
    %v228 = vpack.c.b16 %v181, %v180
    %v229 = vpack.c.b16 %v183, %v182
    %v230 = vpack.c.b16 %v185, %v184
    %v231 = vpack.c.b16 %v187, %v186
    %v232 = vpack.c.b16 %v189, %v188
    %v233 = vpack.c.b16 %v191, %v190
    %v234 = vpack.c.b16 %v193, %v192
    %v235 = vpack.c.b16 %v195, %v194
    %v236 = vpack.c.b16 %v197, %v196
    %v237 = vpack.c.b16 %v199, %v198
    %v238 = vpack.c.b16 %v201, %v200
    %v239 = vpack.c.b16 %v203, %v202
    %v240 = vpack.c.b16 %v205, %v204
    %v241 = vpack.c.b16 %v207, %v206
    %v242 = vpack.c.b16 %v209, %v208
    %v243 = vpack.c.b16 %v211, %v210
    %v249 = vunpack.c.l.b16 %v79
    %v250 = vunpack.c.l.b16 %v80
    %v251 = vunpack.c.l.b16 %v81
    %v252 = vunpack.c.l.b16 %v82
    %v253 = vunpack.c.l.b16 %v83
    %v254 = vpack.c.b16 %v250, %v249
    %v255 = vpack.c.b16 %v252, %v251
    %v256 = vpack.c.b16 %v253, %v253
    %vm259 = vcmask 293888
    %v261 = vsel %vm259, %v212, 0
    %v264 = vsel %vm259, %v213, 0
    %v267 = vsel %vm259, %v214, 0
    %v270 = vsel %vm259, %v215, 0
    %v273 = vsel %vm259, %v216, 0
    %v276 = vsel %vm259, %v217, 0
    %v279 = vsel %vm259, %v218, 0
    %v282 = vsel %vm259, %v219, 0
    %v285 = vsel %vm259, %v220, 0
    %v288 = vsel %vm259, %v221, 0
    %v291 = vsel %vm259, %v222, 0
    %v294 = vsel %vm259, %v223, 0
    %v297 = vsel %vm259, %v224, 0
    %v300 = vsel %vm259, %v225, 0
    %v303 = vsel %vm259, %v226, 0
    %v306 = vsel %vm259, %v227, 0
    %v309 = vsel %vm259, %v228, 0
    %v312 = vsel %vm259, %v229, 0
    %v315 = vsel %vm259, %v230, 0
    %v318 = vsel %vm259, %v231, 0
    %v321 = vsel %vm259, %v232, 0
    %v324 = vsel %vm259, %v233, 0
    %v327 = vsel %vm259, %v234, 0
    %v330 = vsel %vm259, %v235, 0
    %v333 = vsel %vm259, %v236, 0
    %v336 = vsel %vm259, %v237, 0
    %v339 = vsel %vm259, %v238, 0
    %v342 = vsel %vm259, %v239, 0
    %v345 = vsel %vm259, %v240, 0
    %v348 = vsel %vm259, %v241, 0
    %v351 = vsel %vm259, %v242, 0
    %v354 = vsel %vm259, %v243, 0
    %vm356 = vcmask 1041408
    %v358 = vsel %vm356, %v256, 0
    %360 = vmatpush.bf16.msra.mxu0 0
    %361 = vmatpush.bf16.msra.mxu0 0
    %362 = vmatpush.bf16.msra.mxu0 0
    %363 = vmatpush.bf16.msra.mxu0 0
    %364 = vmatpush.bf16.msra.mxu0 0
    %365 = vmatpush.bf16.msra.mxu0 %v358
    %366 = vmatpush.bf16.msra.mxu0 %v255
    %367 = vmatpush.bf16.msra.mxu0 %v254
    %368 = vmatmul.bf16.gmra.mxu0 %v261
    %v369 = vpop.f32.mrf.mxu0
    %v370 = vadd.f32 0.0, %v369
    %v371 = vpop.f32.mrf.mxu0
    %v372 = vadd.f32 0.0, %v371
    %373 = vmatmul.bf16.gmra.mxu0 %v264
    %v374 = vpop.f32.mrf.mxu0
    %v375 = vadd.f32 0.0, %v374
    %v376 = vpop.f32.mrf.mxu0
    %v377 = vadd.f32 0.0, %v376
    %378 = vmatmul.bf16.gmra.mxu0 %v267
    %v379 = vpop.f32.mrf.mxu0
    %v380 = vadd.f32 0.0, %v379
    %v381 = vpop.f32.mrf.mxu0
    %v382 = vadd.f32 0.0, %v381
    %383 = vmatmul.bf16.gmra.mxu0 %v270
    %v384 = vpop.f32.mrf.mxu0
    %v385 = vadd.f32 0.0, %v384
    %v386 = vpop.f32.mrf.mxu0
    %v387 = vadd.f32 0.0, %v386
    %388 = vmatmul.bf16.gmra.mxu0 %v273
    %v389 = vpop.f32.mrf.mxu0
    %v390 = vadd.f32 0.0, %v389
    %v391 = vpop.f32.mrf.mxu0
    %v392 = vadd.f32 0.0, %v391
    %393 = vmatmul.bf16.gmra.mxu0 %v276
    %v394 = vpop.f32.mrf.mxu0
    %v395 = vadd.f32 0.0, %v394
    %v396 = vpop.f32.mrf.mxu0
    %v397 = vadd.f32 0.0, %v396
    %398 = vmatmul.bf16.gmra.mxu0 %v279
    %v399 = vpop.f32.mrf.mxu0
    %v400 = vadd.f32 0.0, %v399
    %v401 = vpop.f32.mrf.mxu0
    %v402 = vadd.f32 0.0, %v401
    %403 = vmatmul.bf16.gmra.mxu0 %v282
    %v404 = vpop.f32.mrf.mxu0
    %v405 = vadd.f32 0.0, %v404
    %v406 = vpop.f32.mrf.mxu0
    %v407 = vadd.f32 0.0, %v406
    %408 = vmatmul.bf16.gmra.mxu0 %v285
    %v409 = vpop.f32.mrf.mxu0
    %v410 = vadd.f32 0.0, %v409
    %v411 = vpop.f32.mrf.mxu0
    %v412 = vadd.f32 0.0, %v411
    %413 = vmatmul.bf16.gmra.mxu0 %v288
    %v414 = vpop.f32.mrf.mxu0
    %v415 = vadd.f32 0.0, %v414
    %v416 = vpop.f32.mrf.mxu0
    %v417 = vadd.f32 0.0, %v416
    %418 = vmatmul.bf16.gmra.mxu0 %v291
    %v419 = vpop.f32.mrf.mxu0
    %v420 = vadd.f32 0.0, %v419
    %v421 = vpop.f32.mrf.mxu0
    %v422 = vadd.f32 0.0, %v421
    %423 = vmatmul.bf16.gmra.mxu0 %v294
    %v424 = vpop.f32.mrf.mxu0
    %v425 = vadd.f32 0.0, %v424
    %v426 = vpop.f32.mrf.mxu0
    %v427 = vadd.f32 0.0, %v426
    %428 = vmatmul.bf16.gmra.mxu0 %v297
    %v429 = vpop.f32.mrf.mxu0
    %v430 = vadd.f32 0.0, %v429
    %v431 = vpop.f32.mrf.mxu0
    %v432 = vadd.f32 0.0, %v431
    %433 = vmatmul.bf16.gmra.mxu0 %v300
    %v434 = vpop.f32.mrf.mxu0
    %v435 = vadd.f32 0.0, %v434
    %v436 = vpop.f32.mrf.mxu0
    %v437 = vadd.f32 0.0, %v436
    %438 = vmatmul.bf16.gmra.mxu0 %v303
    %v439 = vpop.f32.mrf.mxu0
    %v440 = vadd.f32 0.0, %v439
    %v441 = vpop.f32.mrf.mxu0
    %v442 = vadd.f32 0.0, %v441
    %443 = vmatmul.bf16.gmra.mxu0 %v306
    %v444 = vpop.f32.mrf.mxu0
    %v445 = vadd.f32 0.0, %v444
    %v446 = vpop.f32.mrf.mxu0
    %v447 = vadd.f32 0.0, %v446
    %448 = vmatmul.bf16.gmra.mxu0 %v309
    %v449 = vpop.f32.mrf.mxu0
    %v450 = vadd.f32 0.0, %v449
    %v451 = vpop.f32.mrf.mxu0
    %v452 = vadd.f32 0.0, %v451
    %453 = vmatmul.bf16.gmra.mxu0 %v312
    %v454 = vpop.f32.mrf.mxu0
    %v455 = vadd.f32 0.0, %v454
    %v456 = vpop.f32.mrf.mxu0
    %v457 = vadd.f32 0.0, %v456
    %458 = vmatmul.bf16.gmra.mxu0 %v315
    %v459 = vpop.f32.mrf.mxu0
    %v460 = vadd.f32 0.0, %v459
    %v461 = vpop.f32.mrf.mxu0
    %v462 = vadd.f32 0.0, %v461
    %463 = vmatmul.bf16.gmra.mxu0 %v318
    %v464 = vpop.f32.mrf.mxu0
    %v465 = vadd.f32 0.0, %v464
    %v466 = vpop.f32.mrf.mxu0
    %v467 = vadd.f32 0.0, %v466
    %468 = vmatmul.bf16.gmra.mxu0 %v321
    %v469 = vpop.f32.mrf.mxu0
    %v470 = vadd.f32 0.0, %v469
    %v471 = vpop.f32.mrf.mxu0
    %v472 = vadd.f32 0.0, %v471
    %473 = vmatmul.bf16.gmra.mxu0 %v324
    %v474 = vpop.f32.mrf.mxu0
    %v475 = vadd.f32 0.0, %v474
    %v476 = vpop.f32.mrf.mxu0
    %v477 = vadd.f32 0.0, %v476
    %478 = vmatmul.bf16.gmra.mxu0 %v327
    %v479 = vpop.f32.mrf.mxu0
    %v480 = vadd.f32 0.0, %v479
    %v481 = vpop.f32.mrf.mxu0
    %v482 = vadd.f32 0.0, %v481
    %483 = vmatmul.bf16.gmra.mxu0 %v330
    %v484 = vpop.f32.mrf.mxu0
    %v485 = vadd.f32 0.0, %v484
    %v486 = vpop.f32.mrf.mxu0
    %v487 = vadd.f32 0.0, %v486
    %488 = vmatmul.bf16.gmra.mxu0 %v333
    %v489 = vpop.f32.mrf.mxu0
    %v490 = vadd.f32 0.0, %v489
    %v491 = vpop.f32.mrf.mxu0
    %v492 = vadd.f32 0.0, %v491
    %493 = vmatmul.bf16.gmra.mxu0 %v336
    %v494 = vpop.f32.mrf.mxu0
    %v495 = vadd.f32 0.0, %v494
    %v496 = vpop.f32.mrf.mxu0
    %v497 = vadd.f32 0.0, %v496
    %498 = vmatmul.bf16.gmra.mxu0 %v339
    %v499 = vpop.f32.mrf.mxu0
    %v500 = vadd.f32 0.0, %v499
    %v501 = vpop.f32.mrf.mxu0
    %v502 = vadd.f32 0.0, %v501
    %503 = vmatmul.bf16.gmra.mxu0 %v342
    %v504 = vpop.f32.mrf.mxu0
    %v505 = vadd.f32 0.0, %v504
    %v506 = vpop.f32.mrf.mxu0
    %v507 = vadd.f32 0.0, %v506
    %508 = vmatmul.bf16.gmra.mxu0 %v345
    %v509 = vpop.f32.mrf.mxu0
    %v510 = vadd.f32 0.0, %v509
    %v511 = vpop.f32.mrf.mxu0
    %v512 = vadd.f32 0.0, %v511
    %513 = vmatmul.bf16.gmra.mxu0 %v348
    %v514 = vpop.f32.mrf.mxu0
    %v515 = vadd.f32 0.0, %v514
    %v516 = vpop.f32.mrf.mxu0
    %v517 = vadd.f32 0.0, %v516
    %518 = vmatmul.bf16.gmra.mxu0 %v351
    %v519 = vpop.f32.mrf.mxu0
    %v520 = vadd.f32 0.0, %v519
    %v521 = vpop.f32.mrf.mxu0
    %v522 = vadd.f32 0.0, %v521
    %523 = vmatmul.bf16.gmra.mxu0 %v354
    %v524 = vpop.f32.mrf.mxu0
    %v525 = vadd.f32 0.0, %v524
    %v526 = vpop.f32.mrf.mxu0
    %v527 = vadd.f32 0.0, %v526
    %528 = vdwg.mxu0
    %vm529 = vcmask 64512
    %530 = vst.msk [vmem:[%s2] sm:$0xff] %vm529, %v370
    %531 = vst.msk [vmem:[%s2 + $0x8] sm:$0xff] %vm529, %v372
    %532 = vst.msk [vmem:[%s2 + $0x10] sm:$0xff] %vm529, %v375
    %533 = vst.msk [vmem:[%s2 + $0x18] sm:$0xff] %vm529, %v377
    %534 = vst.msk [vmem:[%s2 + $0x20] sm:$0xff] %vm529, %v380
    %535 = vst.msk [vmem:[%s2 + $0x28] sm:$0xff] %vm529, %v382
    %536 = vst.msk [vmem:[%s2 + $0x30] sm:$0xff] %vm529, %v385
    %537 = vst.msk [vmem:[%s2 + $0x38] sm:$0xff] %vm529, %v387
    %538 = vst.msk [vmem:[%s2 + $0x40] sm:$0xff] %vm529, %v390
    %539 = vst.msk [vmem:[%s2 + $0x48] sm:$0xff] %vm529, %v392
    %540 = vst.msk [vmem:[%s2 + $0x50] sm:$0xff] %vm529, %v395
    %541 = vst.msk [vmem:[%s2 + $0x58] sm:$0xff] %vm529, %v397
    %542 = vst.msk [vmem:[%s2 + $0x60] sm:$0xff] %vm529, %v400
    %543 = vst.msk [vmem:[%s2 + $0x68] sm:$0xff] %vm529, %v402
    %544 = vst.msk [vmem:[%s2 + $0x70] sm:$0xff] %vm529, %v405
    %545 = vst.msk [vmem:[%s2 + $0x78] sm:$0xff] %vm529, %v407
    %546 = vst.msk [vmem:[%s2 + $0x80] sm:$0xff] %vm529, %v410
    %547 = vst.msk [vmem:[%s2 + $0x88] sm:$0xff] %vm529, %v412
    %548 = vst.msk [vmem:[%s2 + $0x90] sm:$0xff] %vm529, %v415
    %549 = vst.msk [vmem:[%s2 + $0x98] sm:$0xff] %vm529, %v417
    %550 = vst.msk [vmem:[%s2 + $0xa0] sm:$0xff] %vm529, %v420
    %551 = vst.msk [vmem:[%s2 + $0xa8] sm:$0xff] %vm529, %v422
    %552 = vst.msk [vmem:[%s2 + $0xb0] sm:$0xff] %vm529, %v425
    %553 = vst.msk [vmem:[%s2 + $0xb8] sm:$0xff] %vm529, %v427
    %554 = vst.msk [vmem:[%s2 + $0xc0] sm:$0xff] %vm529, %v430
    %555 = vst.msk [vmem:[%s2 + $0xc8] sm:$0xff] %vm529, %v432
    %556 = vst.msk [vmem:[%s2 + $0xd0] sm:$0xff] %vm529, %v435
    %557 = vst.msk [vmem:[%s2 + $0xd8] sm:$0xff] %vm529, %v437
    %558 = vst.msk [vmem:[%s2 + $0xe0] sm:$0xff] %vm529, %v440
    %559 = vst.msk [vmem:[%s2 + $0xe8] sm:$0xff] %vm529, %v442
    %560 = vst.msk [vmem:[%s2 + $0xf0] sm:$0xff] %vm529, %v445
    %561 = vst.msk [vmem:[%s2 + $0xf8] sm:$0xff] %vm529, %v447
    %562 = vst.msk [vmem:[%s2 + $0x100] sm:$0xff] %vm529, %v450
    %563 = vst.msk [vmem:[%s2 + $0x108] sm:$0xff] %vm529, %v452
    %564 = vst.msk [vmem:[%s2 + $0x110] sm:$0xff] %vm529, %v455
    %565 = vst.msk [vmem:[%s2 + $0x118] sm:$0xff] %vm529, %v457
    %566 = vst.msk [vmem:[%s2 + $0x120] sm:$0xff] %vm529, %v460
    %567 = vst.msk [vmem:[%s2 + $0x128] sm:$0xff] %vm529, %v462
    %568 = vst.msk [vmem:[%s2 + $0x130] sm:$0xff] %vm529, %v465
    %569 = vst.msk [vmem:[%s2 + $0x138] sm:$0xff] %vm529, %v467
    %570 = vst.msk [vmem:[%s2 + $0x140] sm:$0xff] %vm529, %v470
    %571 = vst.msk [vmem:[%s2 + $0x148] sm:$0xff] %vm529, %v472
    %572 = vst.msk [vmem:[%s2 + $0x150] sm:$0xff] %vm529, %v475
    %573 = vst.msk [vmem:[%s2 + $0x158] sm:$0xff] %vm529, %v477
    %574 = vst.msk [vmem:[%s2 + $0x160] sm:$0xff] %vm529, %v480
    %575 = vst.msk [vmem:[%s2 + $0x168] sm:$0xff] %vm529, %v482
    %576 = vst.msk [vmem:[%s2 + $0x170] sm:$0xff] %vm529, %v485
    %577 = vst.msk [vmem:[%s2 + $0x178] sm:$0xff] %vm529, %v487
    %578 = vst.msk [vmem:[%s2 + $0x180] sm:$0xff] %vm529, %v490
    %579 = vst.msk [vmem:[%s2 + $0x188] sm:$0xff] %vm529, %v492
    %580 = vst.msk [vmem:[%s2 + $0x190] sm:$0xff] %vm529, %v495
    %581 = vst.msk [vmem:[%s2 + $0x198] sm:$0xff] %vm529, %v497
    %582 = vst.msk [vmem:[%s2 + $0x1a0] sm:$0xff] %vm529, %v500
    %583 = vst.msk [vmem:[%s2 + $0x1a8] sm:$0xff] %vm529, %v502
    %584 = vst.msk [vmem:[%s2 + $0x1b0] sm:$0xff] %vm529, %v505
    %585 = vst.msk [vmem:[%s2 + $0x1b8] sm:$0xff] %vm529, %v507
    %586 = vst.msk [vmem:[%s2 + $0x1c0] sm:$0xff] %vm529, %v510
    %587 = vst.msk [vmem:[%s2 + $0x1c8] sm:$0xff] %vm529, %v512
    %588 = vst.msk [vmem:[%s2 + $0x1d0] sm:$0xff] %vm529, %v515
    %589 = vst.msk [vmem:[%s2 + $0x1d8] sm:$0xff] %vm529, %v517
    %590 = vst.msk [vmem:[%s2 + $0x1e0] sm:$0xff] %vm529, %v520
    %591 = vst.msk [vmem:[%s2 + $0x1e8] sm:$0xff] %vm529, %v522
    %592 = vst.msk [vmem:[%s2 + $0x1f0] sm:$0xff] %vm529, %v525
    %593 = vst.msk [vmem:[%s2 + $0x1f8] sm:$0xff] %vm529, %v527
    %v594 = vsel %vm529, %v370, 0.0
    %v595 = vsel %vm529, %v372, 0.0
    %v596 = vadd.f32 %v594, %v595
    %v597 = vsel %vm529, %v375, 0.0
    %v598 = vadd.f32 %v596, %v597
    %v599 = vsel %vm529, %v377, 0.0
    %v600 = vadd.f32 %v598, %v599
    %v601 = vsel %vm529, %v380, 0.0
    %v602 = vadd.f32 %v600, %v601
    %v603 = vsel %vm529, %v382, 0.0
    %v604 = vadd.f32 %v602, %v603
    %v605 = vsel %vm529, %v385, 0.0
    %v606 = vadd.f32 %v604, %v605
    %v607 = vsel %vm529, %v387, 0.0
    %v608 = vadd.f32 %v606, %v607
    %v609 = vsel %vm529, %v390, 0.0
    %v610 = vadd.f32 %v608, %v609
    %v611 = vsel %vm529, %v392, 0.0
    %v612 = vadd.f32 %v610, %v611
    %v613 = vsel %vm529, %v395, 0.0
    %v614 = vadd.f32 %v612, %v613
    %v615 = vsel %vm529, %v397, 0.0
    %v616 = vadd.f32 %v614, %v615
    %v617 = vsel %vm529, %v400, 0.0
    %v618 = vadd.f32 %v616, %v617
    %v619 = vsel %vm529, %v402, 0.0
    %v620 = vadd.f32 %v618, %v619
    %v621 = vsel %vm529, %v405, 0.0
    %v622 = vadd.f32 %v620, %v621
    %v623 = vsel %vm529, %v407, 0.0
    %v624 = vadd.f32 %v622, %v623
    %v625 = vsel %vm529, %v410, 0.0
    %v626 = vadd.f32 %v624, %v625
    %v627 = vsel %vm529, %v412, 0.0
    %v628 = vadd.f32 %v626, %v627
    %v629 = vsel %vm529, %v415, 0.0
    %v630 = vadd.f32 %v628, %v629
    %v631 = vsel %vm529, %v417, 0.0
    %v632 = vadd.f32 %v630, %v631
    %v633 = vsel %vm529, %v420, 0.0
    %v634 = vadd.f32 %v632, %v633
    %v635 = vsel %vm529, %v422, 0.0
    %v636 = vadd.f32 %v634, %v635
    %v637 = vsel %vm529, %v425, 0.0
    %v638 = vadd.f32 %v636, %v637
    %v639 = vsel %vm529, %v427, 0.0
    %v640 = vadd.f32 %v638, %v639
    %v641 = vsel %vm529, %v430, 0.0
    %v642 = vadd.f32 %v640, %v641
    %v643 = vsel %vm529, %v432, 0.0
    %v644 = vadd.f32 %v642, %v643
    %v645 = vsel %vm529, %v435, 0.0
    %v646 = vadd.f32 %v644, %v645
    %v647 = vsel %vm529, %v437, 0.0
    %v648 = vadd.f32 %v646, %v647
    %v649 = vsel %vm529, %v440, 0.0
    %v650 = vadd.f32 %v648, %v649
    %v651 = vsel %vm529, %v442, 0.0
    %v652 = vadd.f32 %v650, %v651
    %v653 = vsel %vm529, %v445, 0.0
    %v654 = vadd.f32 %v652, %v653
    %v655 = vsel %vm529, %v447, 0.0
    %v656 = vadd.f32 %v654, %v655
    %v657 = vsel %vm529, %v450, 0.0
    %v658 = vadd.f32 %v656, %v657
    %v659 = vsel %vm529, %v452, 0.0
    %v660 = vadd.f32 %v658, %v659
    %v661 = vsel %vm529, %v455, 0.0
    %v662 = vadd.f32 %v660, %v661
    %v663 = vsel %vm529, %v457, 0.0
    %v664 = vadd.f32 %v662, %v663
    %v665 = vsel %vm529, %v460, 0.0
    %v666 = vadd.f32 %v664, %v665
    %v667 = vsel %vm529, %v462, 0.0
    %v668 = vadd.f32 %v666, %v667
    %v669 = vsel %vm529, %v465, 0.0
    %v670 = vadd.f32 %v668, %v669
    %v671 = vsel %vm529, %v467, 0.0
    %v672 = vadd.f32 %v670, %v671
    %v673 = vsel %vm529, %v470, 0.0
    %v674 = vadd.f32 %v672, %v673
    %v675 = vsel %vm529, %v472, 0.0
    %v676 = vadd.f32 %v674, %v675
    %v677 = vsel %vm529, %v475, 0.0
    %v678 = vadd.f32 %v676, %v677
    %v679 = vsel %vm529, %v477, 0.0
    %v680 = vadd.f32 %v678, %v679
    %v681 = vsel %vm529, %v480, 0.0
    %v682 = vadd.f32 %v680, %v681
    %v683 = vsel %vm529, %v482, 0.0
    %v684 = vadd.f32 %v682, %v683
    %v685 = vsel %vm529, %v485, 0.0
    %v686 = vadd.f32 %v684, %v685
    %v687 = vsel %vm529, %v487, 0.0
    %v688 = vadd.f32 %v686, %v687
    %v689 = vsel %vm529, %v490, 0.0
    %v690 = vadd.f32 %v688, %v689
    %v691 = vsel %vm529, %v492, 0.0
    %v692 = vadd.f32 %v690, %v691
    %v693 = vsel %vm529, %v495, 0.0
    %v694 = vadd.f32 %v692, %v693
    %v695 = vsel %vm529, %v497, 0.0
    %v696 = vadd.f32 %v694, %v695
    %v697 = vsel %vm529, %v500, 0.0
    %v698 = vadd.f32 %v696, %v697
    %v699 = vsel %vm529, %v502, 0.0
    %v700 = vadd.f32 %v698, %v699
    %v701 = vsel %vm529, %v505, 0.0
    %v702 = vadd.f32 %v700, %v701
    %v703 = vsel %vm529, %v507, 0.0
    %v704 = vadd.f32 %v702, %v703
    %v705 = vsel %vm529, %v510, 0.0
    %v706 = vadd.f32 %v704, %v705
    %v707 = vsel %vm529, %v512, 0.0
    %v708 = vadd.f32 %v706, %v707
    %v709 = vsel %vm529, %v515, 0.0
    %v710 = vadd.f32 %v708, %v709
    %v711 = vsel %vm529, %v517, 0.0
    %v712 = vadd.f32 %v710, %v711
    %v713 = vsel %vm529, %v520, 0.0
    %v714 = vadd.f32 %v712, %v713
    %v715 = vsel %vm529, %v522, 0.0
    %v716 = vadd.f32 %v714, %v715
    %v717 = vsel %vm529, %v525, 0.0
    %v718 = vadd.f32 %v716, %v717
    %v719 = vsel %vm529, %v527, 0.0
    %v720 = vadd.f32 %v718, %v719
    %v721 = vrot.slane %v720, 4
    %v722 = vadd.f32 %v720, %v721
    %v723 = vrot.slane %v722, 2
    %v724 = vadd.f32 %v722, %v723
    %v725 = vrot.slane %v724, 1
    %v726 = vadd.f32 %v724, %v725
    %vm727 = vcmask 57344
    %728 = vst.msk [vmem:[#allocation2] sm:$0x1] %vm727, %v726
    %v729 = vmul.f32 %v370, %v370
    %v730 = vmul.f32 %v372, %v372
    %v731 = vmul.f32 %v375, %v375
    %v732 = vmul.f32 %v377, %v377
    %v733 = vmul.f32 %v380, %v380
    %v734 = vmul.f32 %v382, %v382
    %v735 = vmul.f32 %v385, %v385
    %v736 = vmul.f32 %v387, %v387
    %v737 = vmul.f32 %v390, %v390
    %v738 = vmul.f32 %v392, %v392
    %v739 = vmul.f32 %v395, %v395
    %v740 = vmul.f32 %v397, %v397
    %v741 = vmul.f32 %v400, %v400
    %v742 = vmul.f32 %v402, %v402
    %v743 = vmul.f32 %v405, %v405
    %v744 = vmul.f32 %v407, %v407
    %v745 = vmul.f32 %v410, %v410
    %v746 = vmul.f32 %v412, %v412
    %v747 = vmul.f32 %v415, %v415
    %v748 = vmul.f32 %v417, %v417
    %v749 = vmul.f32 %v420, %v420
    %v750 = vmul.f32 %v422, %v422
    %v751 = vmul.f32 %v425, %v425
    %v752 = vmul.f32 %v427, %v427
    %v753 = vmul.f32 %v430, %v430
    %v754 = vmul.f32 %v432, %v432
    %v755 = vmul.f32 %v435, %v435
    %v756 = vmul.f32 %v437, %v437
    %v757 = vmul.f32 %v440, %v440
    %v758 = vmul.f32 %v442, %v442
    %v759 = vmul.f32 %v445, %v445
    %v760 = vmul.f32 %v447, %v447
    %v761 = vmul.f32 %v450, %v450
    %v762 = vmul.f32 %v452, %v452
    %v763 = vmul.f32 %v455, %v455
    %v764 = vmul.f32 %v457, %v457
    %v765 = vmul.f32 %v460, %v460
    %v766 = vmul.f32 %v462, %v462
    %v767 = vmul.f32 %v465, %v465
    %v768 = vmul.f32 %v467, %v467
    %v769 = vmul.f32 %v470, %v470
    %v770 = vmul.f32 %v472, %v472
    %v771 = vmul.f32 %v475, %v475
    %v772 = vmul.f32 %v477, %v477
    %v773 = vmul.f32 %v480, %v480
    %v774 = vmul.f32 %v482, %v482
    %v775 = vmul.f32 %v485, %v485
    %v776 = vmul.f32 %v487, %v487
    %v777 = vmul.f32 %v490, %v490
    %v778 = vmul.f32 %v492, %v492
    %v779 = vmul.f32 %v495, %v495
    %v780 = vmul.f32 %v497, %v497
    %v781 = vmul.f32 %v500, %v500
    %v782 = vmul.f32 %v502, %v502
    %v783 = vmul.f32 %v505, %v505
    %v784 = vmul.f32 %v507, %v507
    %v785 = vmul.f32 %v510, %v510
    %v786 = vmul.f32 %v512, %v512
    %v787 = vmul.f32 %v515, %v515
    %v788 = vmul.f32 %v517, %v517
    %v789 = vmul.f32 %v520, %v520
    %v790 = vmul.f32 %v522, %v522
    %v791 = vmul.f32 %v525, %v525
    %v792 = vmul.f32 %v527, %v527
    %v793 = vsel %vm529, %v729, 0.0
    %v794 = vsel %vm529, %v730, 0.0
    %v795 = vadd.f32 %v793, %v794
    %v796 = vsel %vm529, %v731, 0.0
    %v797 = vadd.f32 %v795, %v796
    %v798 = vsel %vm529, %v732, 0.0
    %v799 = vadd.f32 %v797, %v798
    %v800 = vsel %vm529, %v733, 0.0
    %v801 = vadd.f32 %v799, %v800
    %v802 = vsel %vm529, %v734, 0.0
    %v803 = vadd.f32 %v801, %v802
    %v804 = vsel %vm529, %v735, 0.0
    %v805 = vadd.f32 %v803, %v804
    %v806 = vsel %vm529, %v736, 0.0
    %v807 = vadd.f32 %v805, %v806
    %v808 = vsel %vm529, %v737, 0.0
    %v809 = vadd.f32 %v807, %v808
    %v810 = vsel %vm529, %v738, 0.0
    %v811 = vadd.f32 %v809, %v810
    %v812 = vsel %vm529, %v739, 0.0
    %v813 = vadd.f32 %v811, %v812
    %v814 = vsel %vm529, %v740, 0.0
    %v815 = vadd.f32 %v813, %v814
    %v816 = vsel %vm529, %v741, 0.0
    %v817 = vadd.f32 %v815, %v816
    %v818 = vsel %vm529, %v742, 0.0
    %v819 = vadd.f32 %v817, %v818
    %v820 = vsel %vm529, %v743, 0.0
    %v821 = vadd.f32 %v819, %v820
    %v822 = vsel %vm529, %v744, 0.0
    %v823 = vadd.f32 %v821, %v822
    %v824 = vsel %vm529, %v745, 0.0
    %v825 = vadd.f32 %v823, %v824
    %v826 = vsel %vm529, %v746, 0.0
    %v827 = vadd.f32 %v825, %v826
    %v828 = vsel %vm529, %v747, 0.0
    %v829 = vadd.f32 %v827, %v828
    %v830 = vsel %vm529, %v748, 0.0
    %v831 = vadd.f32 %v829, %v830
    %v832 = vsel %vm529, %v749, 0.0
    %v833 = vadd.f32 %v831, %v832
    %v834 = vsel %vm529, %v750, 0.0
    %v835 = vadd.f32 %v833, %v834
    %v836 = vsel %vm529, %v751, 0.0
    %v837 = vadd.f32 %v835, %v836
    %v838 = vsel %vm529, %v752, 0.0
    %v839 = vadd.f32 %v837, %v838
    %v840 = vsel %vm529, %v753, 0.0
    %v841 = vadd.f32 %v839, %v840
    %v842 = vsel %vm529, %v754, 0.0
    %v843 = vadd.f32 %v841, %v842
    %v844 = vsel %vm529, %v755, 0.0
    %v845 = vadd.f32 %v843, %v844
    %v846 = vsel %vm529, %v756, 0.0
    %v847 = vadd.f32 %v845, %v846
    %v848 = vsel %vm529, %v757, 0.0
    %v849 = vadd.f32 %v847, %v848
    %v850 = vsel %vm529, %v758, 0.0
    %v851 = vadd.f32 %v849, %v850
    %v852 = vsel %vm529, %v759, 0.0
    %v853 = vadd.f32 %v851, %v852
    %v854 = vsel %vm529, %v760, 0.0
    %v855 = vadd.f32 %v853, %v854
    %v856 = vsel %vm529, %v761, 0.0
    %v857 = vadd.f32 %v855, %v856
    %v858 = vsel %vm529, %v762, 0.0
    %v859 = vadd.f32 %v857, %v858
    %v860 = vsel %vm529, %v763, 0.0
    %v861 = vadd.f32 %v859, %v860
    %v862 = vsel %vm529, %v764, 0.0
    %v863 = vadd.f32 %v861, %v862
    %v864 = vsel %vm529, %v765, 0.0
    %v865 = vadd.f32 %v863, %v864
    %v866 = vsel %vm529, %v766, 0.0
    %v867 = vadd.f32 %v865, %v866
    %v868 = vsel %vm529, %v767, 0.0
    %v869 = vadd.f32 %v867, %v868
    %v870 = vsel %vm529, %v768, 0.0
    %v871 = vadd.f32 %v869, %v870
    %v872 = vsel %vm529, %v769, 0.0
    %v873 = vadd.f32 %v871, %v872
    %v874 = vsel %vm529, %v770, 0.0
    %v875 = vadd.f32 %v873, %v874
    %v876 = vsel %vm529, %v771, 0.0
    %v877 = vadd.f32 %v875, %v876
    %v878 = vsel %vm529, %v772, 0.0
    %v879 = vadd.f32 %v877, %v878
    %v880 = vsel %vm529, %v773, 0.0
    %v881 = vadd.f32 %v879, %v880
    %v882 = vsel %vm529, %v774, 0.0
    %v883 = vadd.f32 %v881, %v882
    %v884 = vsel %vm529, %v775, 0.0
    %v885 = vadd.f32 %v883, %v884
    %v886 = vsel %vm529, %v776, 0.0
    %v887 = vadd.f32 %v885, %v886
    %v888 = vsel %vm529, %v777, 0.0
    %v889 = vadd.f32 %v887, %v888
    %v890 = vsel %vm529, %v778, 0.0
    %v891 = vadd.f32 %v889, %v890
    %v892 = vsel %vm529, %v779, 0.0
    %v893 = vadd.f32 %v891, %v892
    %v894 = vsel %vm529, %v780, 0.0
    %v895 = vadd.f32 %v893, %v894
    %v896 = vsel %vm529, %v781, 0.0
    %v897 = vadd.f32 %v895, %v896
    %v898 = vsel %vm529, %v782, 0.0
    %v899 = vadd.f32 %v897, %v898
    %v900 = vsel %vm529, %v783, 0.0
    %v901 = vadd.f32 %v899, %v900
    %v902 = vsel %vm529, %v784, 0.0
    %v903 = vadd.f32 %v901, %v902
    %v904 = vsel %vm529, %v785, 0.0
    %v905 = vadd.f32 %v903, %v904
    %v906 = vsel %vm529, %v786, 0.0
    %v907 = vadd.f32 %v905, %v906
    %v908 = vsel %vm529, %v787, 0.0
    %v909 = vadd.f32 %v907, %v908
    %v910 = vsel %vm529, %v788, 0.0
    %v911 = vadd.f32 %v909, %v910
    %v912 = vsel %vm529, %v789, 0.0
    %v913 = vadd.f32 %v911, %v912
    %v914 = vsel %vm529, %v790, 0.0
    %v915 = vadd.f32 %v913, %v914
    %v916 = vsel %vm529, %v791, 0.0
    %v917 = vadd.f32 %v915, %v916
    %v918 = vsel %vm529, %v792, 0.0
    %v919 = vadd.f32 %v917, %v918
    %v920 = vrot.slane %v919, 4
    %v921 = vadd.f32 %v919, %v920
    %v922 = vrot.slane %v921, 2
    %v923 = vadd.f32 %v921, %v922
    %v924 = vrot.slane %v923, 1
    %v925 = vadd.f32 %v923, %v924
    %926 = vst.msk [vmem:[#allocation2 + $0x1] sm:$0x1] %vm727, %v925
    // Predicated region
    $region10: #{tpu_custom_call.1} parent=1 // pred_check
      _
    $region11: #{tpu_custom_call.1} parent=1 // pred_check_branch
      %928 = sbr.rel (0) target = $region13
    $region12: #{tpu_custom_call.1} parent=1 // pred_region
      _
    $region13: #{tpu_custom_call.1} parent=1 // pred_fallthru
      _
    // Predicated region
    $region14: #{tpu_custom_call.1} parent=1 // pred_check
      _
    $region15: #{tpu_custom_call.1} parent=1 // pred_check_branch
      %930 = sbr.rel (0) target = $region17
    $region16: #{tpu_custom_call.1} parent=1 // pred_region
      %932 = vsyncadd [#allocation3], 0
      %s934 = sshll.u32 [#allocation2], 4
      %s935 = int_to_ptr.vmem [resolvable:$true] %s934
      %s936 = sshll.u32 %s3, 4
      %s937 = int_to_ptr.hbm [resolvable:$true] %s936
      %939 = dma.vmem_to_hbm [thread:$0]  %s935, 32, %s937, [#allocation3]
    $region17: #{tpu_custom_call.1} parent=1 // pred_fallthru
      _
    // Predicated region
    $region18: #{tpu_custom_call.1} parent=1 // pred_check
      _
    $region19: #{tpu_custom_call.1} parent=1 // pred_check_branch
      %941 = sbr.rel (0) target = $region21
    $region20: #{tpu_custom_call.1} parent=1 // pred_region
      _
    $region21: #{tpu_custom_call.1} parent=1 // pred_fallthru
      _
    // Predicated region
    $region22: #{tpu_custom_call.1} parent=1 // pred_check
      _
    $region23: #{tpu_custom_call.1} parent=1 // pred_check_branch
      %943 = sbr.rel (0) target = $region25
    $region24: #{tpu_custom_call.1} parent=1 // pred_region
      %945 = dma.done [#allocation3], 32
    $region25: #{tpu_custom_call.1} parent=1 // pred_fallthru
      _
    %946 = vsyncpa [#allocation3], 1

</llo_original>
